<compile_context>
chip_gen: v5e
topology: v5e:2x2
jax: 0.10.0
libtpu: 0.0.40
codegen_flags: <defaults>
</compile_context>

<pallas_src>
import jax
import jax.numpy as jnp
from jax.experimental import pallas as pl
from jax.experimental.pallas import tpu as pltpu


def _round_up(x, m):
    return (x + m - 1) // m * m


def _pad2(a, rows, cols):
    return jnp.pad(a, ((0, rows - a.shape[0]), (0, cols - a.shape[1])))


# ---------------------------------------------------------------------------
# Kernel 1: standalone feature transform  XW = X @ W  (K-tiled, f32 accumulator)
# Only used for layer 1 (x @ W1); later transforms are fused into the previous
# layer's aggregation epilogue.
# ---------------------------------------------------------------------------
def _xw_kernel(x_ref, w_ref, o_ref, acc_ref):
    kf = pl.program_id(1)

    @pl.when(kf == 0)
    def _():
        acc_ref[...] = jnp.zeros_like(acc_ref)

    acc_ref[...] += jnp.dot(x_ref[...], w_ref[...],
                            preferred_element_type=jnp.float32)

    @pl.when(kf == pl.num_programs(1) - 1)
    def _():
        o_ref[...] = acc_ref[...].astype(o_ref.dtype)


def _feature_transform(x, w, *, tm, tk):
    n, f_in = x.shape
    f_out = w.shape[1]

    flops = 2 * n * f_in * f_out
    bytes_accessed = (x.size * x.dtype.itemsize + w.size * w.dtype.itemsize
                      + n * f_out * 2)
    need = (2 * tm * tk * x.dtype.itemsize      # x tiles, double-buffered
            + 2 * tk * f_out * w.dtype.itemsize  # w tiles, double-buffered
            + 2 * tm * f_out * 2                 # bf16 output block
            + tm * f_out * 4)                    # f32 accumulator
    return pl.pallas_call(
        _xw_kernel,
        out_shape=jax.ShapeDtypeStruct((n, f_out), jnp.bfloat16),
        grid_spec=pltpu.PrefetchScalarGridSpec(
            num_scalar_prefetch=0,
            grid=(n // tm, f_in // tk),
            in_specs=[
                pl.BlockSpec((tm, tk), lambda i, k: (i, k)),
                pl.BlockSpec((tk, f_out), lambda i, k: (k, 0)),
            ],
            out_specs=pl.BlockSpec((tm, f_out), lambda i, k: (i, 0)),
            scratch_shapes=[pltpu.VMEM((tm, f_out), jnp.float32)],
        ),
        compiler_params=pltpu.CompilerParams(
            dimension_semantics=("parallel", "arbitrary"),
            vmem_limit_bytes=int(min(need + (16 << 20), 56 << 20))),
        cost_estimate=pl.CostEstimate(flops=flops, transcendentals=0,
                                      bytes_accessed=bytes_accessed),
    )(x, w)


# ---------------------------------------------------------------------------
# Kernel 2: aggregation  out = act(adj @ XW + b), with fused epilogue options:
#   * multiply by the next layer's weight (producing next-layer XW), or
#   * log_softmax over the (masked) class axis.
# Grid = (row tiles [parallel], k tiles [reduction, arbitrary, last]).
# ---------------------------------------------------------------------------
def _make_agg_kernel(*, apply_relu, apply_log_softmax, valid_cols, tk,
                     xw_resident, has_w_next, acc_in_out):
    def kernel(*refs):
        adj_ref, xw_ref, b_ref = refs[0], refs[1], refs[2]
        pos = 3
        if has_w_next:
            w_next_ref = refs[pos]
            pos += 1
        o_ref = refs[pos]
        pos += 1
        acc_ref = o_ref if acc_in_out else refs[pos]

        k = pl.program_id(1)

        @pl.when(k == 0)
        def _():
            acc_ref[...] = jnp.zeros_like(acc_ref)

        if xw_resident:
            start = pl.multiple_of(k * tk, 128)
            xw_k = xw_ref[pl.ds(start, tk), :]
        else:
            xw_k = xw_ref[...]
        acc_ref[...] += jnp.dot(adj_ref[...], xw_k,
                                preferred_element_type=jnp.float32)

        @pl.when(k == pl.num_programs(1) - 1)
        def _():
            h = acc_ref[...] + b_ref[...]              # f32 bias add
            if apply_relu:
                h = jnp.maximum(h, 0.0)
            if apply_log_softmax:
                # Mask the zero-padded class columns out of the softmax (f32 math).
                col = jax.lax.broadcasted_iota(jnp.int32, h.shape, 1)
                h = jnp.where(col < valid_cols, h, -jnp.inf)
                m = jnp.max(h, axis=1, keepdims=True)
                s = h - m
                lse = jnp.log(jnp.sum(jnp.exp(s), axis=1, keepdims=True))
                h = s - lse
            if has_w_next:
                # Fused next-layer feature transform: output is XW for the next layer.
                h = jnp.dot(h.astype(w_next_ref.dtype), w_next_ref[...],
                            preferred_element_type=jnp.float32)
            o_ref[...] = h.astype(o_ref.dtype)

    return kernel


def _aggregate(adj, xw, b, *, tm, tk, apply_relu, w_next=None,
               apply_log_softmax=False, valid_cols=0, out_dtype=jnp.bfloat16,
               xw_resident_budget=16 << 20):
    n = adj.shape[0]
    f_in = xw.shape[1]
    has_w_next = w_next is not None
    f_out = w_next.shape[1] if has_w_next else f_in
    # Final (f32) layer: accumulate directly into the resident output block.
    acc_in_out = (not has_w_next) and out_dtype == jnp.float32

    xw_bytes = xw.size * xw.dtype.itemsize
    # Hold XW fully resident when it fits (counting a conservative double buffer);
    # otherwise stream it per k-tile, amortized by the large tm.
    xw_resident = 2 * xw_bytes <= xw_resident_budget

    in_specs = [pl.BlockSpec((tm, tk), lambda i, k: (i, k))]       # adj tile (streamed)
    if xw_resident:
        in_specs.append(pl.BlockSpec((n, f_in), lambda i, k: (0, 0)))   # XW resident
    else:
        in_specs.append(pl.BlockSpec((tk, f_in), lambda i, k: (k, 0)))  # XW streamed
    in_specs.append(pl.BlockSpec((1, f_in), lambda i, k: (0, 0)))       # bias (f32)
    operands = [adj, xw, b]
    if has_w_next:
        in_specs.append(pl.BlockSpec((f_in, f_out), lambda i, k: (0, 0)))
        operands.append(w_next)

    scratch_shapes = [] if acc_in_out else [pltpu.VMEM((tm, f_in), jnp.float32)]

    flops = 2 * n * n * f_in + (2 * n * f_in * f_out if has_w_next else 0)
    transcendentals = n * f_in if apply_log_softmax else 0
    xw_traffic = xw_bytes if xw_resident else (n // tm) * xw_bytes
    bytes_accessed = (n * n * adj.dtype.itemsize + xw_traffic
                      + b.size * b.dtype.itemsize
                      + (w_next.size * w_next.dtype.itemsize if has_w_next else 0)
                      + n * f_out * jnp.dtype(out_dtype).itemsize)

    need = (2 * tm * tk * adj.dtype.itemsize
            + (2 * xw_bytes if xw_resident else 2 * tk * f_in * xw.dtype.itemsize)
            + 2 * b.size * b.dtype.itemsize
            + (2 * f_in * f_out * w_next.dtype.itemsize if has_w_next else 0)
            + 2 * tm * f_out * jnp.dtype(out_dtype).itemsize
            + (0 if acc_in_out else tm * f_in * 4))

    kernel = _make_agg_kernel(apply_relu=apply_relu,
                              apply_log_softmax=apply_log_softmax,
                              valid_cols=valid_cols, tk=tk,
                              xw_resident=xw_resident,
                              has_w_next=has_w_next, acc_in_out=acc_in_out)
    return pl.pallas_call(
        kernel,
        out_shape=jax.ShapeDtypeStruct((n, f_out), out_dtype),
        grid_spec=pltpu.PrefetchScalarGridSpec(
            num_scalar_prefetch=0,
            grid=(n // tm, n // tk),
            in_specs=in_specs,
            out_specs=pl.BlockSpec((tm, f_out), lambda i, k: (i, 0)),
            scratch_shapes=scratch_shapes,
        ),
        compiler_params=pltpu.CompilerParams(
            dimension_semantics=("parallel", "arbitrary"),
            vmem_limit_bytes=int(min(need + (16 << 20), 56 << 20))),
        cost_estimate=pl.CostEstimate(flops=flops,
                                      transcendentals=transcendentals,
                                      bytes_accessed=bytes_accessed),
    )(*operands)


# ---------------------------------------------------------------------------
# Full forward
# ---------------------------------------------------------------------------
def gcn_forward(x, adj, params, *, tm=512, tk=512):
    """GCN forward (eval mode). x: [N, nfeat] f32, adj: [N, N] f32 dense, params f32."""
    w1, b1, w2, b2, w3, b3 = params
    n, nfeat = x.shape
    nhid = w1.shape[1]
    nclass = w3.shape[1]

    # Tile selection: clamp to the (128-rounded) problem and keep tm/tk divisor-aligned
    # so row padding is capped at max(tm, tk) instead of lcm(tm, tk).
    n128 = _round_up(n, 128)
    tm = min(tm, n128)
    tk = min(tk, n128)
    if tk % tm != 0 and tm % tk != 0:
        tk = tm
    n_pad = _round_up(n, max(tm, tk))

    f_hid = _round_up(nhid, 128)
    f_cls = _round_up(nclass, 128)
    f_in128 = _round_up(nfeat, 128)
    tkf = min(512, f_in128)          # K-tile for the layer-1 feature transform
    f_in = _round_up(nfeat, tkf)

    # bf16 MXU operands (zero padding keeps the math unchanged); biases stay f32.
    x_p = _pad2(x, n_pad, f_in).astype(jnp.bfloat16)
    adj_p = _pad2(adj, n_pad, n_pad).astype(jnp.bfloat16)
    w1_p = _pad2(w1, f_in, f_hid).astype(jnp.bfloat16)
    w2_p = _pad2(w2, f_hid, f_hid).astype(jnp.bfloat16)
    w3_p = _pad2(w3, f_hid, f_cls).astype(jnp.bfloat16)
    b1_p = _pad2(b1, 1, f_hid).astype(jnp.float32)
    b2_p = _pad2(b2, 1, f_hid).astype(jnp.float32)
    b3_p = _pad2(b3, 1, f_cls).astype(jnp.float32)

    # XW1 = x @ W1 (only standalone feature transform).
    xw = _feature_transform(x_p, w1_p, tm=tm, tk=tkf)

    # layer 1: relu(adj @ XW1 + b1) fused with the layer-2 transform  -> XW2
    # (dropout == identity in eval mode)
    xw = _aggregate(adj_p, xw, b1_p, tm=tm, tk=tk, apply_relu=True, w_next=w2_p)

    # layer 2: relu(adj @ XW2 + b2) fused with the layer-3 transform  -> XW3
    xw = _aggregate(adj_p, xw, b2_p, tm=tm, tk=tk, apply_relu=True, w_next=w3_p)

    # layer 3: adj @ XW3 + b3, fused log_softmax over the class axis (f32 output).
    out_p = _aggregate(adj_p, xw, b3_p, tm=tm, tk=tk, apply_relu=False,
                       apply_log_softmax=True, valid_cols=nclass,
                       out_dtype=jnp.float32)

    return out_p[:n, :nclass]


def init_params(key, nfeat, nhid, nclass):
    # Deterministic init mimicking GraphConvolution's uniform(-stdv, stdv), stdv = 1/sqrt(out)
    ks = jax.random.split(key, 6)

    def uni(k, shape, out_dim):
        stdv = 1.0 / jnp.sqrt(out_dim)
        return jax.random.uniform(k, shape, jnp.float32, -stdv, stdv)

    w1 = uni(ks[0], (nfeat, nhid), nhid)
    b1 = uni(ks[1], (1, nhid), nhid)
    w2 = uni(ks[2], (nhid, nhid), nhid)
    b2 = uni(ks[3], (1, nhid), nhid)
    w3 = uni(ks[4], (nhid, nclass), nclass)
    b3 = uni(ks[5], (1, nclass), nclass)
    return (w1, b1, w2, b2, w3, b3)


if __name__ == "__main__":
    key = jax.random.PRNGKey(0)
    k_x, k_adj, k_p = jax.random.split(key, 3)

    # Small, deliberately non-aligned shapes to exercise the padding / tiling path.
    N, nfeat, nhid, nclass = 300, 100, 64, 10

    x = jax.random.normal(k_x, (N, nfeat), jnp.float32)

    # symmetric row-normalized adjacency with self loops (deterministic)
    a = (jax.random.uniform(k_adj, (N, N)) > 0.9).astype(jnp.float32)
    a = jnp.maximum(a, a.T) + jnp.eye(N, dtype=jnp.float32)
    deg = jnp.sum(a, axis=1, keepdims=True)
    adj = a / deg

    params = init_params(k_p, nfeat, nhid, nclass)

    out = gcn_forward(x, adj, params)
    jax.block_until_ready(out)

    # pure-JAX f32 reference (loose tolerance: kernel uses bf16 MXU inputs)
    w1, b1, w2, b2, w3, b3 = params
    h_ref = jnp.maximum(adj @ (x @ w1) + b1, 0.0)
    h_ref = jnp.maximum(adj @ (h_ref @ w2) + b2, 0.0)
    h_ref = adj @ (h_ref @ w3) + b3
    ref = jax.nn.log_softmax(h_ref, axis=1)

    row_prob_sum = jnp.sum(jnp.exp(out), axis=1)
    assert out.shape == (N, nclass)
    assert bool(jnp.all(jnp.abs(row_prob_sum - 1.0) < 1e-4))
    assert bool(jnp.max(jnp.abs(out - ref)) < 0.1)

    print("KERNEL_OK")
</pallas_src>

<mosaic_0001>
module attributes {stable_mosaic.version = 11 : i64} {
  func.func @_xw_kernel(%arg0: i32, %arg1: i32, %arg2: memref<384x128xbf16, #tpu.memory_space<vmem>>, %arg3: memref<128x128xbf16, #tpu.memory_space<vmem>>, %arg4: memref<384x128xbf16, #tpu.memory_space<vmem>>, %arg5: memref<384x128xf32, #tpu.memory_space<vmem>>) attributes {dimension_semantics = [#tpu.dimension_semantics<parallel>, #tpu.dimension_semantics<arbitrary>], iteration_bounds = array<i64: 1, 1>, scalar_prefetch = 0 : i64, scratch_operands = 1 : i64, tpu.core_type = #tpu.core_type<tc>, window_params = [{transform_indices = @transform_0, window_bounds = array<i64: 384, 128>}, {transform_indices = @transform_1, window_bounds = array<i64: 128, 128>}, {transform_indices = @transform_2, window_bounds = array<i64: 384, 128>}]} {
    %c0_i32 = arith.constant 0 : i32
    %0 = arith.cmpi eq, %arg1, %c0_i32 : i32
    %1 = arith.extui %0 : i1 to i32
    %c0_i32_0 = arith.constant 0 : i32
    %2 = arith.cmpi ne, %1, %c0_i32_0 : i32
    scf.if %2 {
      %cst_10 = arith.constant 0.000000e+00 : f32
      %12 = vector.broadcast %cst_10 : f32 to vector<384x128xf32>
      %c0_11 = arith.constant 0 : index
      %c0_12 = arith.constant 0 : index
      %13 = vector.load %arg5[%c0_11, %c0_12] : memref<384x128xf32, #tpu.memory_space<vmem>>, vector<384x128xf32>
      tpu.vector_store %arg5[%c0_11, %c0_12], %12 {strides = array<i32>} : memref<384x128xf32, #tpu.memory_space<vmem>>, vector<384x128xf32>,
    } else {
    }
    %c0 = arith.constant 0 : index
    %c0_1 = arith.constant 0 : index
    %3 = vector.load %arg5[%c0, %c0_1] : memref<384x128xf32, #tpu.memory_space<vmem>>, vector<384x128xf32>
    %c0_2 = arith.constant 0 : index
    %c0_3 = arith.constant 0 : index
    %4 = vector.load %arg2[%c0_2, %c0_3] : memref<384x128xbf16, #tpu.memory_space<vmem>>, vector<384x128xbf16>
    %c0_4 = arith.constant 0 : index
    %c0_5 = arith.constant 0 : index
    %5 = vector.load %arg3[%c0_4, %c0_5] : memref<128x128xbf16, #tpu.memory_space<vmem>>, vector<128x128xbf16>
    %cst = arith.constant dense<0.000000e+00> : vector<384x128xf32>
    %6 = tpu.matmul %4, %5, %cst {dimension_numbers = #tpu.dot_dimension_numbers<[1], [0], [0], [1], [0, 0, 1, 1], [], []>} : vector<384x128xbf16>, vector<128x128xbf16>, vector<384x128xf32> -> vector<384x128xf32>
    %7 = arith.addf %3, %6 : vector<384x128xf32>
    %c0_6 = arith.constant 0 : index
    %c0_7 = arith.constant 0 : index
    %8 = vector.load %arg5[%c0_6, %c0_7] : memref<384x128xf32, #tpu.memory_space<vmem>>, vector<384x128xf32>
    tpu.vector_store %arg5[%c0_6, %c0_7], %7 {strides = array<i32>} : memref<384x128xf32, #tpu.memory_space<vmem>>, vector<384x128xf32>,
    %c0_i32_8 = arith.constant 0 : i32
    %9 = arith.cmpi eq, %arg1, %c0_i32_8 : i32
    %10 = arith.extui %9 : i1 to i32
    %c0_i32_9 = arith.constant 0 : i32
    %11 = arith.cmpi ne, %10, %c0_i32_9 : i32
    scf.if %11 {
      %c0_10 = arith.constant 0 : index
      %c0_11 = arith.constant 0 : index
      %12 = vector.load %arg5[%c0_10, %c0_11] : memref<384x128xf32, #tpu.memory_space<vmem>>, vector<384x128xf32>
      %13 = arith.truncf %12 : vector<384x128xf32> to vector<384x128xbf16>
      %c0_12 = arith.constant 0 : index
      %c0_13 = arith.constant 0 : index
      %14 = vector.load %arg4[%c0_12, %c0_13] : memref<384x128xbf16, #tpu.memory_space<vmem>>, vector<384x128xbf16>
      tpu.vector_store %arg4[%c0_12, %c0_13], %13 {strides = array<i32>} : memref<384x128xbf16, #tpu.memory_space<vmem>>, vector<384x128xbf16>,
    } else {
    }
    return
  }
  func.func @transform_0(%arg0: i32, %arg1: i32) -> (i32, i32) {
    %c0_i32 = arith.constant 0 : i32
    return %arg0, %arg1 : i32, i32
  }
  func.func @transform_1(%arg0: i32, %arg1: i32) -> (i32, i32) {
    %c0_i32 = arith.constant 0 : i32
    %c0_i32_0 = arith.constant 0 : i32
    return %arg1, %c0_i32 : i32, i32
  }
  func.func @transform_2(%arg0: i32, %arg1: i32) -> (i32, i32) {
    %c0_i32 = arith.constant 0 : i32
    %c0_i32_0 = arith.constant 0 : i32
    return %arg0, %c0_i32 : i32, i32
  }
}

</mosaic_0001>

<llo_original>
// kernel: tpu_custom_call.1
$region0: #{tpu_custom_call.1}
  #allocation0 [shape = 'u32[]', space=smem, size = 0x4, offset = 0x4, fixed_abs, tag = 'smem constant byte address 0x4 - core index']
  #allocation1 [shape = 'u32[72,128]{1,0:T(1,128)}', space=vmem, size = 0x9000, scoped, tag = 'internal scratch']
  #allocation2 [shape = 'f32[384,128]{1,0:T(8,128)}', space=vmem, size = 0x30000, scoped, tag = 'scratch operand']
  %s0 = inlined_call_operand.hbm [shape: bf16[384,128], index: 0, kind: input, shape index: {}]
  %s1 = inlined_call_operand.hbm [shape: bf16[128,128], index: 1, kind: input, shape index: {}]
  %s2 = inlined_call_operand.hbm [shape: bf16[384,128], index: 2, kind: output, shape index: {}]
  %s3 = sld [smem:[#allocation0]]
  $region34: #{tpu_custom_call.1} parent=0
    _
  %s5 = ssub.s32 1, %s3
  %s6 = scalar_select 0, %s5, %s3
  $region1: #{tpu_custom_call.1} parent=0
    #allocation3 [shape = 'u8[98304]{0}', space=vmem, size = 0x18000, scoped, tag = 'input window, operand 0, single buffered']
    #allocation4 [shape = 's32[1]{0}', space=sflag, size = 0x4, scoped, tag = 'scoped memory for tpu_custom_call.1']
    #allocation5 [shape = 's32[1]{0}', space=sflag, size = 0x4, scoped, tag = 'scoped memory for tpu_custom_call.1']
    #allocation6 [shape = 'u8[32768]{0}', space=vmem, size = 0x8000, scoped, tag = 'input window, operand 1, single buffered']
    #allocation7 [shape = 's32[1]{0}', space=sflag, size = 0x4, scoped, tag = 'scoped memory for tpu_custom_call.1']
    #allocation8 [shape = 'u8[98304]{0}', space=vmem, size = 0x18000, scoped, tag = 'output window, operand 0, single buffered']
    %7 = vsyncpa [#allocation4], 0
    %8 = vsyncpa [#allocation7], 0
    %9 = vsyncpa [#allocation5], 0
    // Predicated region
    $region2: #{tpu_custom_call.1} parent=1 // pred_check
      _
    $region3: #{tpu_custom_call.1} parent=1 // pred_check_branch
      %11 = sbr.rel (0) target = $region5
    $region4: #{tpu_custom_call.1} parent=1 // pred_region
      %13 = vsyncadd [#allocation4], 0
      %s14 = sshll.u32 %s0, 4
      %s15 = int_to_ptr.hbm [resolvable:$true] %s14
      %s16 = sshll.u32 [#allocation3], 4
      %s17 = int_to_ptr.vmem [resolvable:$true] %s16
      %22 = dma.hbm_to_vmem [thread:$0]  %s15, 3072, %s17, [#allocation4], 64, 64, 4
    $region5: #{tpu_custom_call.1} parent=1 // pred_fallthru
      _
    // Predicated region
    $region6: #{tpu_custom_call.1} parent=1 // pred_check
      _
    $region7: #{tpu_custom_call.1} parent=1 // pred_check_branch
      %24 = sbr.rel (0) target = $region9
    $region8: #{tpu_custom_call.1} parent=1 // pred_region
      %26 = vsyncadd [#allocation7], 0
      %s27 = sshll.u32 %s1, 4
      %s28 = int_to_ptr.hbm [resolvable:$true] %s27
      %s29 = sshll.u32 [#allocation6], 4
      %s30 = int_to_ptr.vmem [resolvable:$true] %s29
      %35 = dma.hbm_to_vmem [thread:$0]  %s28, 1024, %s30, [#allocation7], 64, 64, 4
    $region9: #{tpu_custom_call.1} parent=1 // pred_fallthru
      _
    // Predicated region
    $region10: #{tpu_custom_call.1} parent=1 // pred_check
      _
    $region11: #{tpu_custom_call.1} parent=1 // pred_check_branch
      %37 = sbr.rel (0) target = $region13
    $region12: #{tpu_custom_call.1} parent=1 // pred_region
      %39 = dma.done [#allocation4], 3072
    $region13: #{tpu_custom_call.1} parent=1 // pred_fallthru
      _
    // Predicated region
    $region14: #{tpu_custom_call.1} parent=1 // pred_check
      _
    $region15: #{tpu_custom_call.1} parent=1 // pred_check_branch
      %41 = sbr.rel (0) target = $region17
    $region16: #{tpu_custom_call.1} parent=1 // pred_region
      %43 = dma.done [#allocation7], 1024
    $region17: #{tpu_custom_call.1} parent=1 // pred_fallthru
      _
    %p44 = scmp.eq.s32.totalorder 0, 0
    // Predicated region
    $region18: #{tpu_custom_call.1} parent=1 // pred_check
      %p45 = pneg %p44
    $region19: #{tpu_custom_call.1} parent=1 // pred_check_branch
      %47 = sbr.rel (%p45) target = $region21
    $region20: #{tpu_custom_call.1} parent=1 // pred_region
      %48 = vst [vmem:[#allocation2] sm:$0xff] 0.0
      %49 = vst [vmem:[#allocation2 + $0x8] sm:$0xff] 0.0
      %50 = vst [vmem:[#allocation2 + $0x10] sm:$0xff] 0.0
      %51 = vst [vmem:[#allocation2 + $0x18] sm:$0xff] 0.0
      %52 = vst [vmem:[#allocation2 + $0x20] sm:$0xff] 0.0
      %53 = vst [vmem:[#allocation2 + $0x28] sm:$0xff] 0.0
      %54 = vst [vmem:[#allocation2 + $0x30] sm:$0xff] 0.0
      %55 = vst [vmem:[#allocation2 + $0x38] sm:$0xff] 0.0
      %56 = vst [vmem:[#allocation2 + $0x40] sm:$0xff] 0.0
      %57 = vst [vmem:[#allocation2 + $0x48] sm:$0xff] 0.0
      %58 = vst [vmem:[#allocation2 + $0x50] sm:$0xff] 0.0
      %59 = vst [vmem:[#allocation2 + $0x58] sm:$0xff] 0.0
      %60 = vst [vmem:[#allocation2 + $0x60] sm:$0xff] 0.0
      %61 = vst [vmem:[#allocation2 + $0x68] sm:$0xff] 0.0
      %62 = vst [vmem:[#allocation2 + $0x70] sm:$0xff] 0.0
      %63 = vst [vmem:[#allocation2 + $0x78] sm:$0xff] 0.0
      %64 = vst [vmem:[#allocation2 + $0x80] sm:$0xff] 0.0
      %65 = vst [vmem:[#allocation2 + $0x88] sm:$0xff] 0.0
      %66 = vst [vmem:[#allocation2 + $0x90] sm:$0xff] 0.0
      %67 = vst [vmem:[#allocation2 + $0x98] sm:$0xff] 0.0
      %68 = vst [vmem:[#allocation2 + $0xa0] sm:$0xff] 0.0
      %69 = vst [vmem:[#allocation2 + $0xa8] sm:$0xff] 0.0
      %70 = vst [vmem:[#allocation2 + $0xb0] sm:$0xff] 0.0
      %71 = vst [vmem:[#allocation2 + $0xb8] sm:$0xff] 0.0
      %72 = vst [vmem:[#allocation2 + $0xc0] sm:$0xff] 0.0
      %73 = vst [vmem:[#allocation2 + $0xc8] sm:$0xff] 0.0
      %74 = vst [vmem:[#allocation2 + $0xd0] sm:$0xff] 0.0
      %75 = vst [vmem:[#allocation2 + $0xd8] sm:$0xff] 0.0
      %76 = vst [vmem:[#allocation2 + $0xe0] sm:$0xff] 0.0
      %77 = vst [vmem:[#allocation2 + $0xe8] sm:$0xff] 0.0
      %78 = vst [vmem:[#allocation2 + $0xf0] sm:$0xff] 0.0
      %79 = vst [vmem:[#allocation2 + $0xf8] sm:$0xff] 0.0
      %80 = vst [vmem:[#allocation2 + $0x100] sm:$0xff] 0.0
      %81 = vst [vmem:[#allocation2 + $0x108] sm:$0xff] 0.0
      %82 = vst [vmem:[#allocation2 + $0x110] sm:$0xff] 0.0
      %83 = vst [vmem:[#allocation2 + $0x118] sm:$0xff] 0.0
      %84 = vst [vmem:[#allocation2 + $0x120] sm:$0xff] 0.0
      %85 = vst [vmem:[#allocation2 + $0x128] sm:$0xff] 0.0
      %86 = vst [vmem:[#allocation2 + $0x130] sm:$0xff] 0.0
      %87 = vst [vmem:[#allocation2 + $0x138] sm:$0xff] 0.0
      %88 = vst [vmem:[#allocation2 + $0x140] sm:$0xff] 0.0
      %89 = vst [vmem:[#allocation2 + $0x148] sm:$0xff] 0.0
      %90 = vst [vmem:[#allocation2 + $0x150] sm:$0xff] 0.0
      %91 = vst [vmem:[#allocation2 + $0x158] sm:$0xff] 0.0
      %92 = vst [vmem:[#allocation2 + $0x160] sm:$0xff] 0.0
      %93 = vst [vmem:[#allocation2 + $0x168] sm:$0xff] 0.0
      %94 = vst [vmem:[#allocation2 + $0x170] sm:$0xff] 0.0
      %95 = vst [vmem:[#allocation2 + $0x178] sm:$0xff] 0.0
    $region21: #{tpu_custom_call.1} parent=1 // pred_fallthru
      _
    %v96 = vld [vmem:[#allocation2] sm:$0xff]
    %v97 = vld [vmem:[#allocation2 + $0x8] sm:$0xff]
    %v98 = vld [vmem:[#allocation2 + $0x10] sm:$0xff]
    %v99 = vld [vmem:[#allocation2 + $0x18] sm:$0xff]
    %v100 = vld [vmem:[#allocation2 + $0x20] sm:$0xff]
    %v101 = vld [vmem:[#allocation2 + $0x28] sm:$0xff]
    %v102 = vld [vmem:[#allocation2 + $0x30] sm:$0xff]
    %v103 = vld [vmem:[#allocation2 + $0x38] sm:$0xff]
    %v104 = vld [vmem:[#allocation2 + $0x40] sm:$0xff]
    %v105 = vld [vmem:[#allocation2 + $0x48] sm:$0xff]
    %v106 = vld [vmem:[#allocation2 + $0x50] sm:$0xff]
    %v107 = vld [vmem:[#allocation2 + $0x58] sm:$0xff]
    %v108 = vld [vmem:[#allocation2 + $0x60] sm:$0xff]
    %v109 = vld [vmem:[#allocation2 + $0x68] sm:$0xff]
    %v110 = vld [vmem:[#allocation2 + $0x70] sm:$0xff]
    %v111 = vld [vmem:[#allocation2 + $0x78] sm:$0xff]
    %v112 = vld [vmem:[#allocation2 + $0x80] sm:$0xff]
    %v113 = vld [vmem:[#allocation2 + $0x88] sm:$0xff]
    %v114 = vld [vmem:[#allocation2 + $0x90] sm:$0xff]
    %v115 = vld [vmem:[#allocation2 + $0x98] sm:$0xff]
    %v116 = vld [vmem:[#allocation2 + $0xa0] sm:$0xff]
    %v117 = vld [vmem:[#allocation2 + $0xa8] sm:$0xff]
    %v118 = vld [vmem:[#allocation2 + $0xb0] sm:$0xff]
    %v119 = vld [vmem:[#allocation2 + $0xb8] sm:$0xff]
    %v120 = vld [vmem:[#allocation2 + $0xc0] sm:$0xff]
    %v121 = vld [vmem:[#allocation2 + $0xc8] sm:$0xff]
    %v122 = vld [vmem:[#allocation2 + $0xd0] sm:$0xff]
    %v123 = vld [vmem:[#allocation2 + $0xd8] sm:$0xff]
    %v124 = vld [vmem:[#allocation2 + $0xe0] sm:$0xff]
    %v125 = vld [vmem:[#allocation2 + $0xe8] sm:$0xff]
    %v126 = vld [vmem:[#allocation2 + $0xf0] sm:$0xff]
    %v127 = vld [vmem:[#allocation2 + $0xf8] sm:$0xff]
    %v128 = vld [vmem:[#allocation2 + $0x100] sm:$0xff]
    %v129 = vld [vmem:[#allocation2 + $0x108] sm:$0xff]
    %v130 = vld [vmem:[#allocation2 + $0x110] sm:$0xff]
    %v131 = vld [vmem:[#allocation2 + $0x118] sm:$0xff]
    %v132 = vld [vmem:[#allocation2 + $0x120] sm:$0xff]
    %v133 = vld [vmem:[#allocation2 + $0x128] sm:$0xff]
    %v134 = vld [vmem:[#allocation2 + $0x130] sm:$0xff]
    %v135 = vld [vmem:[#allocation2 + $0x138] sm:$0xff]
    %v136 = vld [vmem:[#allocation2 + $0x140] sm:$0xff]
    %v137 = vld [vmem:[#allocation2 + $0x148] sm:$0xff]
    %v138 = vld [vmem:[#allocation2 + $0x150] sm:$0xff]
    %v139 = vld [vmem:[#allocation2 + $0x158] sm:$0xff]
    %v140 = vld [vmem:[#allocation2 + $0x160] sm:$0xff]
    %v141 = vld [vmem:[#allocation2 + $0x168] sm:$0xff]
    %v142 = vld [vmem:[#allocation2 + $0x170] sm:$0xff]
    %v143 = vld [vmem:[#allocation2 + $0x178] sm:$0xff]
    %v144 = vld [vmem:[#allocation3] sm:$0xf]
    %v145 = vld [vmem:[#allocation3 + $0x4] sm:$0xf]
    %v146 = vld [vmem:[#allocation3 + $0x8] sm:$0xf]
    %v147 = vld [vmem:[#allocation3 + $0xc] sm:$0xf]
    %v148 = vld [vmem:[#allocation3 + $0x10] sm:$0xf]
    %v149 = vld [vmem:[#allocation3 + $0x14] sm:$0xf]
    %v150 = vld [vmem:[#allocation3 + $0x18] sm:$0xf]
    %v151 = vld [vmem:[#allocation3 + $0x1c] sm:$0xf]
    %v152 = vld [vmem:[#allocation3 + $0x20] sm:$0xf]
    %v153 = vld [vmem:[#allocation3 + $0x24] sm:$0xf]
    %v154 = vld [vmem:[#allocation3 + $0x28] sm:$0xf]
    %v155 = vld [vmem:[#allocation3 + $0x2c] sm:$0xf]
    %v156 = vld [vmem:[#allocation3 + $0x30] sm:$0xf]
    %v157 = vld [vmem:[#allocation3 + $0x34] sm:$0xf]
    %v158 = vld [vmem:[#allocation3 + $0x38] sm:$0xf]
    %v159 = vld [vmem:[#allocation3 + $0x3c] sm:$0xf]
    %v160 = vld [vmem:[#allocation3 + $0x40] sm:$0xf]
    %v161 = vld [vmem:[#allocation3 + $0x44] sm:$0xf]
    %v162 = vld [vmem:[#allocation3 + $0x48] sm:$0xf]
    %v163 = vld [vmem:[#allocation3 + $0x4c] sm:$0xf]
    %v164 = vld [vmem:[#allocation3 + $0x50] sm:$0xf]
    %v165 = vld [vmem:[#allocation3 + $0x54] sm:$0xf]
    %v166 = vld [vmem:[#allocation3 + $0x58] sm:$0xf]
    %v167 = vld [vmem:[#allocation3 + $0x5c] sm:$0xf]
    %v168 = vld [vmem:[#allocation3 + $0x60] sm:$0xf]
    %v169 = vld [vmem:[#allocation3 + $0x64] sm:$0xf]
    %v170 = vld [vmem:[#allocation3 + $0x68] sm:$0xf]
    %v171 = vld [vmem:[#allocation3 + $0x6c] sm:$0xf]
    %v172 = vld [vmem:[#allocation3 + $0x70] sm:$0xf]
    %v173 = vld [vmem:[#allocation3 + $0x74] sm:$0xf]
    %v174 = vld [vmem:[#allocation3 + $0x78] sm:$0xf]
    %v175 = vld [vmem:[#allocation3 + $0x7c] sm:$0xf]
    %v176 = vld [vmem:[#allocation3 + $0x80] sm:$0xf]
    %v177 = vld [vmem:[#allocation3 + $0x84] sm:$0xf]
    %v178 = vld [vmem:[#allocation3 + $0x88] sm:$0xf]
    %v179 = vld [vmem:[#allocation3 + $0x8c] sm:$0xf]
    %v180 = vld [vmem:[#allocation3 + $0x90] sm:$0xf]
    %v181 = vld [vmem:[#allocation3 + $0x94] sm:$0xf]
    %v182 = vld [vmem:[#allocation3 + $0x98] sm:$0xf]
    %v183 = vld [vmem:[#allocation3 + $0x9c] sm:$0xf]
    %v184 = vld [vmem:[#allocation3 + $0xa0] sm:$0xf]
    %v185 = vld [vmem:[#allocation3 + $0xa4] sm:$0xf]
    %v186 = vld [vmem:[#allocation3 + $0xa8] sm:$0xf]
    %v187 = vld [vmem:[#allocation3 + $0xac] sm:$0xf]
    %v188 = vld [vmem:[#allocation3 + $0xb0] sm:$0xf]
    %v189 = vld [vmem:[#allocation3 + $0xb4] sm:$0xf]
    %v190 = vld [vmem:[#allocation3 + $0xb8] sm:$0xf]
    %v191 = vld [vmem:[#allocation3 + $0xbc] sm:$0xf]
    %v192 = vld [vmem:[#allocation6] sm:$0xf]
    %v193 = vld [vmem:[#allocation6 + $0x4] sm:$0xf]
    %v194 = vld [vmem:[#allocation6 + $0x8] sm:$0xf]
    %v195 = vld [vmem:[#allocation6 + $0xc] sm:$0xf]
    %v196 = vld [vmem:[#allocation6 + $0x10] sm:$0xf]
    %v197 = vld [vmem:[#allocation6 + $0x14] sm:$0xf]
    %v198 = vld [vmem:[#allocation6 + $0x18] sm:$0xf]
    %v199 = vld [vmem:[#allocation6 + $0x1c] sm:$0xf]
    %v200 = vld [vmem:[#allocation6 + $0x20] sm:$0xf]
    %v201 = vld [vmem:[#allocation6 + $0x24] sm:$0xf]
    %v202 = vld [vmem:[#allocation6 + $0x28] sm:$0xf]
    %v203 = vld [vmem:[#allocation6 + $0x2c] sm:$0xf]
    %v204 = vld [vmem:[#allocation6 + $0x30] sm:$0xf]
    %v205 = vld [vmem:[#allocation6 + $0x34] sm:$0xf]
    %v206 = vld [vmem:[#allocation6 + $0x38] sm:$0xf]
    %v207 = vld [vmem:[#allocation6 + $0x3c] sm:$0xf]
    %v256 = vunpack.c.l.b16 %v144
    %v257 = vunpack.c.l.b16 %v145
    %v258 = vunpack.c.l.b16 %v146
    %v259 = vunpack.c.l.b16 %v147
    %v260 = vunpack.c.l.b16 %v148
    %v261 = vunpack.c.l.b16 %v149
    %v262 = vunpack.c.l.b16 %v150
    %v263 = vunpack.c.l.b16 %v151
    %v264 = vunpack.c.l.b16 %v152
    %v265 = vunpack.c.l.b16 %v153
    %v266 = vunpack.c.l.b16 %v154
    %v267 = vunpack.c.l.b16 %v155
    %v268 = vunpack.c.l.b16 %v156
    %v269 = vunpack.c.l.b16 %v157
    %v270 = vunpack.c.l.b16 %v158
    %v271 = vunpack.c.l.b16 %v159
    %v272 = vunpack.c.l.b16 %v160
    %v273 = vunpack.c.l.b16 %v161
    %v274 = vunpack.c.l.b16 %v162
    %v275 = vunpack.c.l.b16 %v163
    %v276 = vunpack.c.l.b16 %v164
    %v277 = vunpack.c.l.b16 %v165
    %v278 = vunpack.c.l.b16 %v166
    %v279 = vunpack.c.l.b16 %v167
    %v280 = vunpack.c.l.b16 %v168
    %v281 = vunpack.c.l.b16 %v169
    %v282 = vunpack.c.l.b16 %v170
    %v283 = vunpack.c.l.b16 %v171
    %v284 = vunpack.c.l.b16 %v172
    %v285 = vunpack.c.l.b16 %v173
    %v286 = vunpack.c.l.b16 %v174
    %v287 = vunpack.c.l.b16 %v175
    %v288 = vunpack.c.l.b16 %v176
    %v289 = vunpack.c.l.b16 %v177
    %v290 = vunpack.c.l.b16 %v178
    %v291 = vunpack.c.l.b16 %v179
    %v292 = vunpack.c.l.b16 %v180
    %v293 = vunpack.c.l.b16 %v181
    %v294 = vunpack.c.l.b16 %v182
    %v295 = vunpack.c.l.b16 %v183
    %v296 = vunpack.c.l.b16 %v184
    %v297 = vunpack.c.l.b16 %v185
    %v298 = vunpack.c.l.b16 %v186
    %v299 = vunpack.c.l.b16 %v187
    %v300 = vunpack.c.l.b16 %v188
    %v301 = vunpack.c.l.b16 %v189
    %v302 = vunpack.c.l.b16 %v190
    %v303 = vunpack.c.l.b16 %v191
    %v304 = vpack.c.b16 %v257, %v256
    %v305 = vpack.c.b16 %v259, %v258
    %v306 = vpack.c.b16 %v261, %v260
    %v307 = vpack.c.b16 %v263, %v262
    %v308 = vpack.c.b16 %v265, %v264
    %v309 = vpack.c.b16 %v267, %v266
    %v310 = vpack.c.b16 %v269, %v268
    %v311 = vpack.c.b16 %v271, %v270
    %v312 = vpack.c.b16 %v273, %v272
    %v313 = vpack.c.b16 %v275, %v274
    %v314 = vpack.c.b16 %v277, %v276
    %v315 = vpack.c.b16 %v279, %v278
    %v316 = vpack.c.b16 %v281, %v280
    %v317 = vpack.c.b16 %v283, %v282
    %v318 = vpack.c.b16 %v285, %v284
    %v319 = vpack.c.b16 %v287, %v286
    %v320 = vpack.c.b16 %v289, %v288
    %v321 = vpack.c.b16 %v291, %v290
    %v322 = vpack.c.b16 %v293, %v292
    %v323 = vpack.c.b16 %v295, %v294
    %v324 = vpack.c.b16 %v297, %v296
    %v325 = vpack.c.b16 %v299, %v298
    %v326 = vpack.c.b16 %v301, %v300
    %v327 = vpack.c.b16 %v303, %v302
    %v368 = vunpack.c.l.b16 %v192
    %v369 = vunpack.c.l.b16 %v193
    %v370 = vunpack.c.l.b16 %v194
    %v371 = vunpack.c.l.b16 %v195
    %v372 = vunpack.c.l.b16 %v196
    %v373 = vunpack.c.l.b16 %v197
    %v374 = vunpack.c.l.b16 %v198
    %v375 = vunpack.c.l.b16 %v199
    %v376 = vunpack.c.l.b16 %v200
    %v377 = vunpack.c.l.b16 %v201
    %v378 = vunpack.c.l.b16 %v202
    %v379 = vunpack.c.l.b16 %v203
    %v380 = vunpack.c.l.b16 %v204
    %v381 = vunpack.c.l.b16 %v205
    %v382 = vunpack.c.l.b16 %v206
    %v383 = vunpack.c.l.b16 %v207
    %v384 = vpack.c.b16 %v369, %v368
    %v385 = vpack.c.b16 %v371, %v370
    %v386 = vpack.c.b16 %v373, %v372
    %v387 = vpack.c.b16 %v375, %v374
    %v388 = vpack.c.b16 %v377, %v376
    %v389 = vpack.c.b16 %v379, %v378
    %v390 = vpack.c.b16 %v381, %v380
    %v391 = vpack.c.b16 %v383, %v382
    %400 = vmatpush.bf16.msra.mxu0 %v391
    %401 = vmatpush.bf16.msra.mxu0 %v390
    %402 = vmatpush.bf16.msra.mxu0 %v389
    %403 = vmatpush.bf16.msra.mxu0 %v388
    %404 = vmatpush.bf16.msra.mxu0 %v387
    %405 = vmatpush.bf16.msra.mxu0 %v386
    %406 = vmatpush.bf16.msra.mxu0 %v385
    %407 = vmatpush.bf16.msra.mxu0 %v384
    %408 = vmatmul.bf16.gmra.mxu0 %v304
    %v409 = vpop.f32.mrf.mxu0
    %v410 = vadd.f32 0.0, %v409
    %v411 = vpop.f32.mrf.mxu0
    %v412 = vadd.f32 0.0, %v411
    %413 = vmatmul.bf16.gmra.mxu0 %v305
    %v414 = vpop.f32.mrf.mxu0
    %v415 = vadd.f32 0.0, %v414
    %v416 = vpop.f32.mrf.mxu0
    %v417 = vadd.f32 0.0, %v416
    %418 = vmatmul.bf16.gmra.mxu0 %v306
    %v419 = vpop.f32.mrf.mxu0
    %v420 = vadd.f32 0.0, %v419
    %v421 = vpop.f32.mrf.mxu0
    %v422 = vadd.f32 0.0, %v421
    %423 = vmatmul.bf16.gmra.mxu0 %v307
    %v424 = vpop.f32.mrf.mxu0
    %v425 = vadd.f32 0.0, %v424
    %v426 = vpop.f32.mrf.mxu0
    %v427 = vadd.f32 0.0, %v426
    %428 = vmatmul.bf16.gmra.mxu0 %v308
    %v429 = vpop.f32.mrf.mxu0
    %v430 = vadd.f32 0.0, %v429
    %v431 = vpop.f32.mrf.mxu0
    %v432 = vadd.f32 0.0, %v431
    %433 = vmatmul.bf16.gmra.mxu0 %v309
    %v434 = vpop.f32.mrf.mxu0
    %v435 = vadd.f32 0.0, %v434
    %v436 = vpop.f32.mrf.mxu0
    %v437 = vadd.f32 0.0, %v436
    %438 = vmatmul.bf16.gmra.mxu0 %v310
    %v439 = vpop.f32.mrf.mxu0
    %v440 = vadd.f32 0.0, %v439
    %v441 = vpop.f32.mrf.mxu0
    %v442 = vadd.f32 0.0, %v441
    %443 = vmatmul.bf16.gmra.mxu0 %v311
    %v444 = vpop.f32.mrf.mxu0
    %v445 = vadd.f32 0.0, %v444
    %v446 = vpop.f32.mrf.mxu0
    %v447 = vadd.f32 0.0, %v446
    %448 = vmatmul.bf16.gmra.mxu0 %v312
    %v449 = vpop.f32.mrf.mxu0
    %v450 = vadd.f32 0.0, %v449
    %v451 = vpop.f32.mrf.mxu0
    %v452 = vadd.f32 0.0, %v451
    %453 = vmatmul.bf16.gmra.mxu0 %v313
    %v454 = vpop.f32.mrf.mxu0
    %v455 = vadd.f32 0.0, %v454
    %v456 = vpop.f32.mrf.mxu0
    %v457 = vadd.f32 0.0, %v456
    %458 = vmatmul.bf16.gmra.mxu0 %v314
    %v459 = vpop.f32.mrf.mxu0
    %v460 = vadd.f32 0.0, %v459
    %v461 = vpop.f32.mrf.mxu0
    %v462 = vadd.f32 0.0, %v461
    %463 = vmatmul.bf16.gmra.mxu0 %v315
    %v464 = vpop.f32.mrf.mxu0
    %v465 = vadd.f32 0.0, %v464
    %v466 = vpop.f32.mrf.mxu0
    %v467 = vadd.f32 0.0, %v466
    %468 = vmatmul.bf16.gmra.mxu0 %v316
    %v469 = vpop.f32.mrf.mxu0
    %v470 = vadd.f32 0.0, %v469
    %v471 = vpop.f32.mrf.mxu0
    %v472 = vadd.f32 0.0, %v471
    %473 = vmatmul.bf16.gmra.mxu0 %v317
    %v474 = vpop.f32.mrf.mxu0
    %v475 = vadd.f32 0.0, %v474
    %v476 = vpop.f32.mrf.mxu0
    %v477 = vadd.f32 0.0, %v476
    %478 = vmatmul.bf16.gmra.mxu0 %v318
    %v479 = vpop.f32.mrf.mxu0
    %v480 = vadd.f32 0.0, %v479
    %v481 = vpop.f32.mrf.mxu0
    %v482 = vadd.f32 0.0, %v481
    %483 = vmatmul.bf16.gmra.mxu0 %v319
    %v484 = vpop.f32.mrf.mxu0
    %v485 = vadd.f32 0.0, %v484
    %v486 = vpop.f32.mrf.mxu0
    %v487 = vadd.f32 0.0, %v486
    %488 = vmatmul.bf16.gmra.mxu0 %v320
    %v489 = vpop.f32.mrf.mxu0
    %v490 = vadd.f32 0.0, %v489
    %v491 = vpop.f32.mrf.mxu0
    %v492 = vadd.f32 0.0, %v491
    %493 = vmatmul.bf16.gmra.mxu0 %v321
    %v494 = vpop.f32.mrf.mxu0
    %v495 = vadd.f32 0.0, %v494
    %v496 = vpop.f32.mrf.mxu0
    %v497 = vadd.f32 0.0, %v496
    %498 = vmatmul.bf16.gmra.mxu0 %v322
    %v499 = vpop.f32.mrf.mxu0
    %v500 = vadd.f32 0.0, %v499
    %v501 = vpop.f32.mrf.mxu0
    %v502 = vadd.f32 0.0, %v501
    %503 = vmatmul.bf16.gmra.mxu0 %v323
    %v504 = vpop.f32.mrf.mxu0
    %v505 = vadd.f32 0.0, %v504
    %v506 = vpop.f32.mrf.mxu0
    %v507 = vadd.f32 0.0, %v506
    %508 = vmatmul.bf16.gmra.mxu0 %v324
    %v509 = vpop.f32.mrf.mxu0
    %v510 = vadd.f32 0.0, %v509
    %v511 = vpop.f32.mrf.mxu0
    %v512 = vadd.f32 0.0, %v511
    %513 = vmatmul.bf16.gmra.mxu0 %v325
    %v514 = vpop.f32.mrf.mxu0
    %v515 = vadd.f32 0.0, %v514
    %v516 = vpop.f32.mrf.mxu0
    %v517 = vadd.f32 0.0, %v516
    %518 = vmatmul.bf16.gmra.mxu0 %v326
    %v519 = vpop.f32.mrf.mxu0
    %v520 = vadd.f32 0.0, %v519
    %v521 = vpop.f32.mrf.mxu0
    %v522 = vadd.f32 0.0, %v521
    %523 = vmatmul.bf16.gmra.mxu0 %v327
    %v524 = vpop.f32.mrf.mxu0
    %v525 = vadd.f32 0.0, %v524
    %v526 = vpop.f32.mrf.mxu0
    %v527 = vadd.f32 0.0, %v526
    %528 = vdwg.mxu0
    %v529 = vadd.f32 %v96, %v410
    %v530 = vadd.f32 %v97, %v412
    %v531 = vadd.f32 %v98, %v415
    %v532 = vadd.f32 %v99, %v417
    %v533 = vadd.f32 %v100, %v420
    %v534 = vadd.f32 %v101, %v422
    %v535 = vadd.f32 %v102, %v425
    %v536 = vadd.f32 %v103, %v427
    %v537 = vadd.f32 %v104, %v430
    %v538 = vadd.f32 %v105, %v432
    %v539 = vadd.f32 %v106, %v435
    %v540 = vadd.f32 %v107, %v437
    %v541 = vadd.f32 %v108, %v440
    %v542 = vadd.f32 %v109, %v442
    %v543 = vadd.f32 %v110, %v445
    %v544 = vadd.f32 %v111, %v447
    %v545 = vadd.f32 %v112, %v450
    %v546 = vadd.f32 %v113, %v452
    %v547 = vadd.f32 %v114, %v455
    %v548 = vadd.f32 %v115, %v457
    %v549 = vadd.f32 %v116, %v460
    %v550 = vadd.f32 %v117, %v462
    %v551 = vadd.f32 %v118, %v465
    %v552 = vadd.f32 %v119, %v467
    %v553 = vadd.f32 %v120, %v470
    %v554 = vadd.f32 %v121, %v472
    %v555 = vadd.f32 %v122, %v475
    %v556 = vadd.f32 %v123, %v477
    %v557 = vadd.f32 %v124, %v480
    %v558 = vadd.f32 %v125, %v482
    %v559 = vadd.f32 %v126, %v485
    %v560 = vadd.f32 %v127, %v487
    %v561 = vadd.f32 %v128, %v490
    %v562 = vadd.f32 %v129, %v492
    %v563 = vadd.f32 %v130, %v495
    %v564 = vadd.f32 %v131, %v497
    %v565 = vadd.f32 %v132, %v500
    %v566 = vadd.f32 %v133, %v502
    %v567 = vadd.f32 %v134, %v505
    %v568 = vadd.f32 %v135, %v507
    %v569 = vadd.f32 %v136, %v510
    %v570 = vadd.f32 %v137, %v512
    %v571 = vadd.f32 %v138, %v515
    %v572 = vadd.f32 %v139, %v517
    %v573 = vadd.f32 %v140, %v520
    %v574 = vadd.f32 %v141, %v522
    %v575 = vadd.f32 %v142, %v525
    %v576 = vadd.f32 %v143, %v527
    %577 = vst [vmem:[#allocation2] sm:$0xff] %v529
    %578 = vst [vmem:[#allocation2 + $0x8] sm:$0xff] %v530
    %579 = vst [vmem:[#allocation2 + $0x10] sm:$0xff] %v531
    %580 = vst [vmem:[#allocation2 + $0x18] sm:$0xff] %v532
    %581 = vst [vmem:[#allocation2 + $0x20] sm:$0xff] %v533
    %582 = vst [vmem:[#allocation2 + $0x28] sm:$0xff] %v534
    %583 = vst [vmem:[#allocation2 + $0x30] sm:$0xff] %v535
    %584 = vst [vmem:[#allocation2 + $0x38] sm:$0xff] %v536
    %585 = vst [vmem:[#allocation2 + $0x40] sm:$0xff] %v537
    %586 = vst [vmem:[#allocation2 + $0x48] sm:$0xff] %v538
    %587 = vst [vmem:[#allocation2 + $0x50] sm:$0xff] %v539
    %588 = vst [vmem:[#allocation2 + $0x58] sm:$0xff] %v540
    %589 = vst [vmem:[#allocation2 + $0x60] sm:$0xff] %v541
    %590 = vst [vmem:[#allocation2 + $0x68] sm:$0xff] %v542
    %591 = vst [vmem:[#allocation2 + $0x70] sm:$0xff] %v543
    %592 = vst [vmem:[#allocation2 + $0x78] sm:$0xff] %v544
    %593 = vst [vmem:[#allocation2 + $0x80] sm:$0xff] %v545
    %594 = vst [vmem:[#allocation2 + $0x88] sm:$0xff] %v546
    %595 = vst [vmem:[#allocation2 + $0x90] sm:$0xff] %v547
    %596 = vst [vmem:[#allocation2 + $0x98] sm:$0xff] %v548
    %597 = vst [vmem:[#allocation2 + $0xa0] sm:$0xff] %v549
    %598 = vst [vmem:[#allocation2 + $0xa8] sm:$0xff] %v550
    %599 = vst [vmem:[#allocation2 + $0xb0] sm:$0xff] %v551
    %600 = vst [vmem:[#allocation2 + $0xb8] sm:$0xff] %v552
    %601 = vst [vmem:[#allocation2 + $0xc0] sm:$0xff] %v553
    %602 = vst [vmem:[#allocation2 + $0xc8] sm:$0xff] %v554
    %603 = vst [vmem:[#allocation2 + $0xd0] sm:$0xff] %v555
    %604 = vst [vmem:[#allocation2 + $0xd8] sm:$0xff] %v556
    %605 = vst [vmem:[#allocation2 + $0xe0] sm:$0xff] %v557
    %606 = vst [vmem:[#allocation2 + $0xe8] sm:$0xff] %v558
    %607 = vst [vmem:[#allocation2 + $0xf0] sm:$0xff] %v559
    %608 = vst [vmem:[#allocation2 + $0xf8] sm:$0xff] %v560
    %609 = vst [vmem:[#allocation2 + $0x100] sm:$0xff] %v561
    %610 = vst [vmem:[#allocation2 + $0x108] sm:$0xff] %v562
    %611 = vst [vmem:[#allocation2 + $0x110] sm:$0xff] %v563
    %612 = vst [vmem:[#allocation2 + $0x118] sm:$0xff] %v564
    %613 = vst [vmem:[#allocation2 + $0x120] sm:$0xff] %v565
    %614 = vst [vmem:[#allocation2 + $0x128] sm:$0xff] %v566
    %615 = vst [vmem:[#allocation2 + $0x130] sm:$0xff] %v567
    %616 = vst [vmem:[#allocation2 + $0x138] sm:$0xff] %v568
    %617 = vst [vmem:[#allocation2 + $0x140] sm:$0xff] %v569
    %618 = vst [vmem:[#allocation2 + $0x148] sm:$0xff] %v570
    %619 = vst [vmem:[#allocation2 + $0x150] sm:$0xff] %v571
    %620 = vst [vmem:[#allocation2 + $0x158] sm:$0xff] %v572
    %621 = vst [vmem:[#allocation2 + $0x160] sm:$0xff] %v573
    %622 = vst [vmem:[#allocation2 + $0x168] sm:$0xff] %v574
    %623 = vst [vmem:[#allocation2 + $0x170] sm:$0xff] %v575
    %624 = vst [vmem:[#allocation2 + $0x178] sm:$0xff] %v576
    // Predicated region
    $region22: #{tpu_custom_call.1} parent=1 // pred_check
      %p625 = pneg %p44
    $region23: #{tpu_custom_call.1} parent=1 // pred_check_branch
      %627 = sbr.rel (%p625) target = $region25
    $region24: #{tpu_custom_call.1} parent=1 // pred_region
      %v628 = vld [vmem:[#allocation2] sm:$0xff]
      %v629 = vld [vmem:[#allocation2 + $0x8] sm:$0xff]
      %v630 = vld [vmem:[#allocation2 + $0x10] sm:$0xff]
      %v631 = vld [vmem:[#allocation2 + $0x18] sm:$0xff]
      %v632 = vld [vmem:[#allocation2 + $0x20] sm:$0xff]
      %v633 = vld [vmem:[#allocation2 + $0x28] sm:$0xff]
      %v634 = vld [vmem:[#allocation2 + $0x30] sm:$0xff]
      %v635 = vld [vmem:[#allocation2 + $0x38] sm:$0xff]
      %v636 = vld [vmem:[#allocation2 + $0x40] sm:$0xff]
      %v637 = vld [vmem:[#allocation2 + $0x48] sm:$0xff]
      %v638 = vld [vmem:[#allocation2 + $0x50] sm:$0xff]
      %v639 = vld [vmem:[#allocation2 + $0x58] sm:$0xff]
      %v640 = vld [vmem:[#allocation2 + $0x60] sm:$0xff]
      %v641 = vld [vmem:[#allocation2 + $0x68] sm:$0xff]
      %v642 = vld [vmem:[#allocation2 + $0x70] sm:$0xff]
      %v643 = vld [vmem:[#allocation2 + $0x78] sm:$0xff]
      %v644 = vld [vmem:[#allocation2 + $0x80] sm:$0xff]
      %v645 = vld [vmem:[#allocation2 + $0x88] sm:$0xff]
      %v646 = vld [vmem:[#allocation2 + $0x90] sm:$0xff]
      %v647 = vld [vmem:[#allocation2 + $0x98] sm:$0xff]
      %v648 = vld [vmem:[#allocation2 + $0xa0] sm:$0xff]
      %v649 = vld [vmem:[#allocation2 + $0xa8] sm:$0xff]
      %v650 = vld [vmem:[#allocation2 + $0xb0] sm:$0xff]
      %v651 = vld [vmem:[#allocation2 + $0xb8] sm:$0xff]
      %v652 = vld [vmem:[#allocation2 + $0xc0] sm:$0xff]
      %v653 = vld [vmem:[#allocation2 + $0xc8] sm:$0xff]
      %v654 = vld [vmem:[#allocation2 + $0xd0] sm:$0xff]
      %v655 = vld [vmem:[#allocation2 + $0xd8] sm:$0xff]
      %v656 = vld [vmem:[#allocation2 + $0xe0] sm:$0xff]
      %v657 = vld [vmem:[#allocation2 + $0xe8] sm:$0xff]
      %v658 = vld [vmem:[#allocation2 + $0xf0] sm:$0xff]
      %v659 = vld [vmem:[#allocation2 + $0xf8] sm:$0xff]
      %v660 = vld [vmem:[#allocation2 + $0x100] sm:$0xff]
      %v661 = vld [vmem:[#allocation2 + $0x108] sm:$0xff]
      %v662 = vld [vmem:[#allocation2 + $0x110] sm:$0xff]
      %v663 = vld [vmem:[#allocation2 + $0x118] sm:$0xff]
      %v664 = vld [vmem:[#allocation2 + $0x120] sm:$0xff]
      %v665 = vld [vmem:[#allocation2 + $0x128] sm:$0xff]
      %v666 = vld [vmem:[#allocation2 + $0x130] sm:$0xff]
      %v667 = vld [vmem:[#allocation2 + $0x138] sm:$0xff]
      %v668 = vld [vmem:[#allocation2 + $0x140] sm:$0xff]
      %v669 = vld [vmem:[#allocation2 + $0x148] sm:$0xff]
      %v670 = vld [vmem:[#allocation2 + $0x150] sm:$0xff]
      %v671 = vld [vmem:[#allocation2 + $0x158] sm:$0xff]
      %v672 = vld [vmem:[#allocation2 + $0x160] sm:$0xff]
      %v673 = vld [vmem:[#allocation2 + $0x168] sm:$0xff]
      %v674 = vld [vmem:[#allocation2 + $0x170] sm:$0xff]
      %v675 = vld [vmem:[#allocation2 + $0x178] sm:$0xff]
      %v676 = vpack.c.bf16 %v628, %v628
      %v677 = vpack.c.bf16 %v629, %v629
      %v678 = vpack.c.bf16 %v630, %v630
      %v679 = vpack.c.bf16 %v631, %v631
      %v680 = vpack.c.bf16 %v632, %v632
      %v681 = vpack.c.bf16 %v633, %v633
      %v682 = vpack.c.bf16 %v634, %v634
      %v683 = vpack.c.bf16 %v635, %v635
      %v684 = vpack.c.bf16 %v636, %v636
      %v685 = vpack.c.bf16 %v637, %v637
      %v686 = vpack.c.bf16 %v638, %v638
      %v687 = vpack.c.bf16 %v639, %v639
      %v688 = vpack.c.bf16 %v640, %v640
      %v689 = vpack.c.bf16 %v641, %v641
      %v690 = vpack.c.bf16 %v642, %v642
      %v691 = vpack.c.bf16 %v643, %v643
      %v692 = vpack.c.bf16 %v644, %v644
      %v693 = vpack.c.bf16 %v645, %v645
      %v694 = vpack.c.bf16 %v646, %v646
      %v695 = vpack.c.bf16 %v647, %v647
      %v696 = vpack.c.bf16 %v648, %v648
      %v697 = vpack.c.bf16 %v649, %v649
      %v698 = vpack.c.bf16 %v650, %v650
      %v699 = vpack.c.bf16 %v651, %v651
      %v700 = vpack.c.bf16 %v652, %v652
      %v701 = vpack.c.bf16 %v653, %v653
      %v702 = vpack.c.bf16 %v654, %v654
      %v703 = vpack.c.bf16 %v655, %v655
      %v704 = vpack.c.bf16 %v656, %v656
      %v705 = vpack.c.bf16 %v657, %v657
      %v706 = vpack.c.bf16 %v658, %v658
      %v707 = vpack.c.bf16 %v659, %v659
      %v708 = vpack.c.bf16 %v660, %v660
      %v709 = vpack.c.bf16 %v661, %v661
      %v710 = vpack.c.bf16 %v662, %v662
      %v711 = vpack.c.bf16 %v663, %v663
      %v712 = vpack.c.bf16 %v664, %v664
      %v713 = vpack.c.bf16 %v665, %v665
      %v714 = vpack.c.bf16 %v666, %v666
      %v715 = vpack.c.bf16 %v667, %v667
      %v716 = vpack.c.bf16 %v668, %v668
      %v717 = vpack.c.bf16 %v669, %v669
      %v718 = vpack.c.bf16 %v670, %v670
      %v719 = vpack.c.bf16 %v671, %v671
      %v720 = vpack.c.bf16 %v672, %v672
      %v721 = vpack.c.bf16 %v673, %v673
      %v722 = vpack.c.bf16 %v674, %v674
      %v723 = vpack.c.bf16 %v675, %v675
      %724 = vst [vmem:[#allocation8] sm:$0xf] %v676
      %725 = vst [vmem:[#allocation8 + $0x4] sm:$0xf] %v677
      %726 = vst [vmem:[#allocation8 + $0x8] sm:$0xf] %v678
      %727 = vst [vmem:[#allocation8 + $0xc] sm:$0xf] %v679
      %728 = vst [vmem:[#allocation8 + $0x10] sm:$0xf] %v680
      %729 = vst [vmem:[#allocation8 + $0x14] sm:$0xf] %v681
      %730 = vst [vmem:[#allocation8 + $0x18] sm:$0xf] %v682
      %731 = vst [vmem:[#allocation8 + $0x1c] sm:$0xf] %v683
      %732 = vst [vmem:[#allocation8 + $0x20] sm:$0xf] %v684
      %733 = vst [vmem:[#allocation8 + $0x24] sm:$0xf] %v685
      %734 = vst [vmem:[#allocation8 + $0x28] sm:$0xf] %v686
      %735 = vst [vmem:[#allocation8 + $0x2c] sm:$0xf] %v687
      %736 = vst [vmem:[#allocation8 + $0x30] sm:$0xf] %v688
      %737 = vst [vmem:[#allocation8 + $0x34] sm:$0xf] %v689
      %738 = vst [vmem:[#allocation8 + $0x38] sm:$0xf] %v690
      %739 = vst [vmem:[#allocation8 + $0x3c] sm:$0xf] %v691
      %740 = vst [vmem:[#allocation8 + $0x40] sm:$0xf] %v692
      %741 = vst [vmem:[#allocation8 + $0x44] sm:$0xf] %v693
      %742 = vst [vmem:[#allocation8 + $0x48] sm:$0xf] %v694
      %743 = vst [vmem:[#allocation8 + $0x4c] sm:$0xf] %v695
      %744 = vst [vmem:[#allocation8 + $0x50] sm:$0xf] %v696
      %745 = vst [vmem:[#allocation8 + $0x54] sm:$0xf] %v697
      %746 = vst [vmem:[#allocation8 + $0x58] sm:$0xf] %v698
      %747 = vst [vmem:[#allocation8 + $0x5c] sm:$0xf] %v699
      %748 = vst [vmem:[#allocation8 + $0x60] sm:$0xf] %v700
      %749 = vst [vmem:[#allocation8 + $0x64] sm:$0xf] %v701
      %750 = vst [vmem:[#allocation8 + $0x68] sm:$0xf] %v702
      %751 = vst [vmem:[#allocation8 + $0x6c] sm:$0xf] %v703
      %752 = vst [vmem:[#allocation8 + $0x70] sm:$0xf] %v704
      %753 = vst [vmem:[#allocation8 + $0x74] sm:$0xf] %v705
      %754 = vst [vmem:[#allocation8 + $0x78] sm:$0xf] %v706
      %755 = vst [vmem:[#allocation8 + $0x7c] sm:$0xf] %v707
      %756 = vst [vmem:[#allocation8 + $0x80] sm:$0xf] %v708
      %757 = vst [vmem:[#allocation8 + $0x84] sm:$0xf] %v709
      %758 = vst [vmem:[#allocation8 + $0x88] sm:$0xf] %v710
      %759 = vst [vmem:[#allocation8 + $0x8c] sm:$0xf] %v711
      %760 = vst [vmem:[#allocation8 + $0x90] sm:$0xf] %v712
      %761 = vst [vmem:[#allocation8 + $0x94] sm:$0xf] %v713
      %762 = vst [vmem:[#allocation8 + $0x98] sm:$0xf] %v714
      %763 = vst [vmem:[#allocation8 + $0x9c] sm:$0xf] %v715
      %764 = vst [vmem:[#allocation8 + $0xa0] sm:$0xf] %v716
      %765 = vst [vmem:[#allocation8 + $0xa4] sm:$0xf] %v717
      %766 = vst [vmem:[#allocation8 + $0xa8] sm:$0xf] %v718
      %767 = vst [vmem:[#allocation8 + $0xac] sm:$0xf] %v719
      %768 = vst [vmem:[#allocation8 + $0xb0] sm:$0xf] %v720
      %769 = vst [vmem:[#allocation8 + $0xb4] sm:$0xf] %v721
      %770 = vst [vmem:[#allocation8 + $0xb8] sm:$0xf] %v722
      %771 = vst [vmem:[#allocation8 + $0xbc] sm:$0xf] %v723
    $region25: #{tpu_custom_call.1} parent=1 // pred_fallthru
      _
    // Predicated region
    $region26: #{tpu_custom_call.1} parent=1 // pred_check
      _
    $region27: #{tpu_custom_call.1} parent=1 // pred_check_branch
      %773 = sbr.rel (0) target = $region29
    $region28: #{tpu_custom_call.1} parent=1 // pred_region
      %775 = vsyncadd [#allocation5], 0
      %s776 = sshll.u32 [#allocation8], 4
      %s777 = int_to_ptr.vmem [resolvable:$true] %s776
      %s778 = sshll.u32 %s2, 4
      %s779 = int_to_ptr.hbm [resolvable:$true] %s778
      %784 = dma.vmem_to_hbm [thread:$0]  %s777, 3072, %s779, [#allocation5], 64, 64, 4
    $region29: #{tpu_custom_call.1} parent=1 // pred_fallthru
      _
    // Predicated region
    $region30: #{tpu_custom_call.1} parent=1 // pred_check
      _
    $region31: #{tpu_custom_call.1} parent=1 // pred_check_branch
      %786 = sbr.rel (0) target = $region33
    $region32: #{tpu_custom_call.1} parent=1 // pred_region
      %788 = dma.done [#allocation5], 3072
    $region33: #{tpu_custom_call.1} parent=1 // pred_fallthru
      _
    %789 = vsyncpa [#allocation4], 1
    %790 = vsyncpa [#allocation7], 1
    %791 = vsyncpa [#allocation5], 1

</llo_original>
